<compile_context>
chip_gen: v6e
topology: v6e:2x2x1
jax: 0.10.0
libtpu: 0.0.40
codegen_flags: <defaults>
</compile_context>

<pallas_src>
import functools

import jax
import jax.numpy as jnp
from jax.experimental import pallas as pl
from jax.experimental.pallas import tpu as pltpu


def _swish(x):
    # swish(x) = x*sigmoid(x) = 0.5*x*(tanh(x/2)+1): a single EUP push (tanh)
    # per element instead of exp + reciprocal/divide.
    return 0.5 * x * (jnp.tanh(0.5 * x) + 1.0)


def mbconv_kernel(x_ref, w0_ref, b0_ref, s1_ref, t1_ref, w1_ref, b1_ref, o_ref,
                  *, expanded_dtype):
    # x_ref block: (1, C, TP) -- channels on sublanes, pixels on lanes.
    x = x_ref[0]                                                     # (C, TP) f32
    # cconv0 (1x1 conv == matmul over channels) with bn0 folded into w0/b0.
    h = jnp.dot(w0_ref[...], x, preferred_element_type=jnp.float32) + b0_ref[...]
    # Optional reduced-precision expanded pathway (bf16 on v6e/v7x); f32 default.
    h = h.astype(expanded_dtype)
    h = _swish(h)
    # NOTE: reference evaluates `x - self.dconv(x)` and throws the result away,
    # so the depthwise conv does not contribute to the output -> skipped here.
    # bn1 (between the two activations, cannot be folded) + swish.
    h = h * s1_ref[...] + t1_ref[...]
    h = _swish(h)
    # cconv1 (1x1 conv back to C channels) with bn2 folded, then residual add.
    y = jnp.dot(w1_ref[...], h, preferred_element_type=jnp.float32) + b1_ref[...]
    o_ref[0] = (y + x).astype(o_ref.dtype)


def _vmem_capacity_bytes():
    """Per-generation VMEM capacity (128 MiB v5e/v6e, 64 MiB per-TC v7x)."""
    try:
        cap = int(pltpu.get_tpu_info().vmem_capacity_bytes)
        if cap > 0:
            return cap
    except Exception:
        pass
    return 64 << 20  # conservative fallback = v7x per-TensorCore VMEM


def _pick_tile_p(N, C, E, HW, tile_budget_bytes):
    """Largest 128-multiple pixel tile whose per-step f32 footprint fits the budget."""
    hw128 = pl.cdiv(HW, 128) * 128
    # Per-lane resident f32 bytes: double-buffered x & out tiles (2*2*C) plus
    # ~3 live (E, tile) temporaries on the expanded pathway.
    bytes_per_lane = 4 * (4 * C + 3 * E)
    tile = (tile_budget_bytes // bytes_per_lane) // 128 * 128
    tile = max(128, min(tile, 8192, hw128))
    # Keep >= ~4 total grid steps (>= 2 per TensorCore on v7x) so the
    # auto-pipeline can prefetch tile i+1 under compute of tile i.
    while tile > 128 and N * pl.cdiv(hw128, tile) < 4:
        tile -= 128
    return tile


def mbconv_forward(x_nchw, params, *, tile_p=None, expanded_dtype=jnp.float32):
    """x_nchw: (N, C, H, W) float32, PyTorch convention.

    expanded_dtype: dtype of the E-wide intermediate pathway. jnp.bfloat16 is
    ~2x cheaper on v6e/v7x (bf16 VPU/EUP, half the temporaries) but deviates
    slightly from the f32 reference; keep f32 on v5e / for bit-accuracy.
    """
    N, C, H, W = x_nchw.shape
    E = params["w0"].shape[0]
    HW = H * W

    # ---- Fold bn0 into cconv0 and bn2 into cconv1 (inference affine fold) ----
    w0f = (params["w0"] * params["s0"][:, None]).astype(jnp.float32)            # (E, C)
    b0f = (params["b0"] * params["s0"] + params["t0"]).reshape(E, 1).astype(jnp.float32)
    w1f = (params["w1"] * params["s2"][:, None]).astype(expanded_dtype)         # (C, E)
    b1f = (params["b1"] * params["s2"] + params["t2"]).reshape(C, 1).astype(jnp.float32)
    s1 = params["s1"].reshape(E, 1).astype(expanded_dtype)
    t1 = params["t1"].reshape(E, 1).astype(expanded_dtype)

    # ---- Lane-dense layout: NCHW viewed as (N, C, H*W); no pad, no slice -----
    x = x_nchw.reshape(N, C, HW).astype(jnp.float32)

    vmem_cap = _vmem_capacity_bytes()
    hw128 = pl.cdiv(HW, 128) * 128
    if tile_p is None:
        tile_p = _pick_tile_p(N, C, E, HW, int(vmem_cap * 0.55))
    else:
        tile_p = max(128, (min(int(tile_p), hw128) // 128) * 128)

    # Ragged last tile (HW % tile_p != 0) is handled by Pallas edge-block
    # masking; all math here is per-pixel so edge lanes never contaminate.
    grid = (N, pl.cdiv(HW, tile_p))

    # Honest VMEM limit: actual tile + param footprint plus headroom, capped
    # below the generation's physical VMEM.
    tile_bytes = 4 * (4 * C + 3 * E) * tile_p
    param_bytes = 2 * 4 * (2 * E * C + 3 * E + 2 * C)
    vmem_limit = int(min(tile_bytes + param_bytes + (12 << 20), (vmem_cap * 3) // 4))

    # Constant params: block index never changes -> DMA'd once; the wasted
    # second pipeline buffer is only a few KiB so it is left at the default.
    const = lambda shape: pl.BlockSpec(shape, lambda n, p: (0, 0))

    kernel = functools.partial(mbconv_kernel, expanded_dtype=expanded_dtype)

    out = pl.pallas_call(
        kernel,
        out_shape=jax.ShapeDtypeStruct((N, C, HW), jnp.float32),
        grid_spec=pltpu.PrefetchScalarGridSpec(
            num_scalar_prefetch=0,
            grid=grid,
            in_specs=[
                pl.BlockSpec((1, C, tile_p), lambda n, p: (n, 0, p)),  # x tile
                const((E, C)),   # w0 (bn0 folded)
                const((E, 1)),   # b0 (bn0 folded)
                const((E, 1)),   # bn1 scale
                const((E, 1)),   # bn1 shift
                const((C, E)),   # w1 (bn2 folded)
                const((C, 1)),   # b1 (bn2 folded)
            ],
            out_specs=pl.BlockSpec((1, C, tile_p), lambda n, p: (n, 0, p)),
        ),
        compiler_params=pltpu.CompilerParams(
            dimension_semantics=("parallel", "parallel"),
            vmem_limit_bytes=vmem_limit,
        ),
    )(x, w0f, b0f, s1, t1, w1f, b1f)

    return out.reshape(N, C, H, W)


def init_params(key, input_channels, expansion_factor):
    """Deterministic synthetic parameters matching MBConv.__init__ shapes."""
    C = input_channels
    E = expansion_factor * C
    ks = jax.random.split(key, 16)

    # cconv0: torch weight (E, C, 1, 1); cconv1: torch weight (C, E, 1, 1)
    w0_t = 0.1 * jax.random.normal(ks[0], (E, C, 1, 1), jnp.float32)
    b0 = 0.1 * jax.random.normal(ks[1], (E,), jnp.float32)
    w1_t = 0.1 * jax.random.normal(ks[2], (C, E, 1, 1), jnp.float32)
    b1 = 0.1 * jax.random.normal(ks[3], (C,), jnp.float32)

    def bn_fold(kg, kb, km, kv, n):
        gamma = 1.0 + 0.1 * jax.random.normal(kg, (n,), jnp.float32)
        beta = 0.1 * jax.random.normal(kb, (n,), jnp.float32)
        mean = 0.1 * jax.random.normal(km, (n,), jnp.float32)
        var = jnp.abs(jax.random.normal(kv, (n,), jnp.float32)) + 0.5
        eps = 1e-5
        scale = gamma / jnp.sqrt(var + eps)
        shift = beta - mean * scale
        return scale, shift

    s0, t0 = bn_fold(ks[4], ks[5], ks[6], ks[7], E)     # bn0 (expanded ch)
    s1, t1 = bn_fold(ks[8], ks[9], ks[10], ks[11], E)   # bn1 (expanded ch)
    s2, t2 = bn_fold(ks[12], ks[13], ks[14], ks[15], C) # bn2 (input ch)

    return {
        "w0": w0_t[:, :, 0, 0],   # (E, C)
        "b0": b0,
        "w1": w1_t[:, :, 0, 0],   # (C, E)
        "b1": b1,
        "s0": s0, "t0": t0,
        "s1": s1, "t1": t1,
        "s2": s2, "t2": t2,
    }


def mbconv_reference(x_nchw, params):
    """Pure-JAX reference (same math, unfolded BN, exact sigmoid) for checking."""
    N, C, H, W = x_nchw.shape
    x = x_nchw.reshape(N, C, -1).astype(jnp.float32)       # (N, C, P)
    b = lambda v: v[None, :, None]
    swish = lambda v: v * jax.nn.sigmoid(v)
    h = jnp.einsum('ec,ncp->nep', params["w0"], x) + b(params["b0"])
    h = h * b(params["s0"]) + b(params["t0"])
    h = swish(h)
    h = h * b(params["s1"]) + b(params["t1"])
    h = swish(h)
    y = jnp.einsum('ce,nep->ncp', params["w1"], h) + b(params["b1"])
    y = y * b(params["s2"]) + b(params["t2"])
    y = y + x
    return y.reshape(N, C, H, W)


if __name__ == "__main__":
    key = jax.random.PRNGKey(0)
    k_x, k_p = jax.random.split(key)

    # small shapes: batch=2, channels=4, spatial=16x16, expansion_factor=4
    N, C, H, W = 2, 4, 16, 16
    expansion_factor = 4

    x = jax.random.normal(k_x, (N, C, H, W), jnp.float32)
    params = init_params(k_p, C, expansion_factor)

    out = mbconv_forward(x, params)
    out = jax.block_until_ready(out)

    ref = mbconv_reference(x, params)
    assert out.shape == (N, C, H, W)
    assert jnp.allclose(out, ref, atol=1e-5, rtol=1e-5), "mismatch vs JAX reference"

    print("KERNEL_OK")
</pallas_src>

<mosaic_0001>
module attributes {stable_mosaic.version = 11 : i64} {
  func.func @mbconv_kernel(%arg0: i32, %arg1: i32, %arg2: memref<1x4x128xf32, #tpu.memory_space<vmem>>, %arg3: memref<16x4xf32, #tpu.memory_space<vmem>>, %arg4: memref<16x1xf32, #tpu.memory_space<vmem>>, %arg5: memref<16x1xf32, #tpu.memory_space<vmem>>, %arg6: memref<16x1xf32, #tpu.memory_space<vmem>>, %arg7: memref<4x16xf32, #tpu.memory_space<vmem>>, %arg8: memref<4x1xf32, #tpu.memory_space<vmem>>, %arg9: memref<1x4x128xf32, #tpu.memory_space<vmem>>) attributes {dimension_semantics = [#tpu.dimension_semantics<parallel>, #tpu.dimension_semantics<parallel>], iteration_bounds = array<i64: 2, 2>, scalar_prefetch = 0 : i64, scratch_operands = 0 : i64, tpu.core_type = #tpu.core_type<tc>, window_params = [{transform_indices = @transform_0, window_bounds = array<i64: 1, 4, 128>}, {pipeline_mode = #tpu.pipeline_mode<synchronous>, transform_indices = @transform_1, window_bounds = array<i64: 16, 4>}, {pipeline_mode = #tpu.pipeline_mode<synchronous>, transform_indices = @transform_2, window_bounds = array<i64: 16, 1>}, {pipeline_mode = #tpu.pipeline_mode<synchronous>, transform_indices = @transform_3, window_bounds = array<i64: 16, 1>}, {pipeline_mode = #tpu.pipeline_mode<synchronous>, transform_indices = @transform_4, window_bounds = array<i64: 16, 1>}, {pipeline_mode = #tpu.pipeline_mode<synchronous>, transform_indices = @transform_5, window_bounds = array<i64: 4, 16>}, {pipeline_mode = #tpu.pipeline_mode<synchronous>, transform_indices = @transform_6, window_bounds = array<i64: 4, 1>}, {transform_indices = @transform_7, window_bounds = array<i64: 1, 4, 128>}]} {
    %c0 = arith.constant 0 : index
    %c0_0 = arith.constant 0 : index
    %c0_1 = arith.constant 0 : index
    %0 = vector.load %arg2[%c0, %c0_0, %c0_1] : memref<1x4x128xf32, #tpu.memory_space<vmem>>, vector<1x4x128xf32>
    %1 = vector.shape_cast %0 : vector<1x4x128xf32> to vector<4x128xf32>
    %c0_2 = arith.constant 0 : index
    %c0_3 = arith.constant 0 : index
    %2 = vector.load %arg3[%c0_2, %c0_3] : memref<16x4xf32, #tpu.memory_space<vmem>>, vector<16x4xf32>
    %cst = arith.constant dense<0.000000e+00> : vector<16x128xf32>
    %3 = tpu.matmul %2, %1, %cst {dimension_numbers = #tpu.dot_dimension_numbers<[1], [0], [0], [1], [0, 0, 1, 1], [], []>} : vector<16x4xf32>, vector<4x128xf32>, vector<16x128xf32> -> vector<16x128xf32>
    %c0_4 = arith.constant 0 : index
    %c0_5 = arith.constant 0 : index
    %4 = vector.load %arg4[%c0_4, %c0_5] : memref<16x1xf32, #tpu.memory_space<vmem>>, vector<16x1xf32>
    %5 = vector.broadcast %4 : vector<16x1xf32> to vector<16x128xf32>
    %6 = arith.addf %3, %5 : vector<16x128xf32>
    %cst_6 = arith.constant 5.000000e-01 : f32
    %7 = vector.broadcast %cst_6 : f32 to vector<16x128xf32>
    %8 = arith.mulf %7, %6 : vector<16x128xf32>
    %cst_7 = arith.constant 5.000000e-01 : f32
    %9 = vector.broadcast %cst_7 : f32 to vector<16x128xf32>
    %10 = arith.mulf %9, %6 : vector<16x128xf32>
    %11 = math.tanh %10 : vector<16x128xf32>
    %cst_8 = arith.constant 1.000000e+00 : f32
    %12 = vector.broadcast %cst_8 : f32 to vector<16x128xf32>
    %13 = arith.addf %11, %12 : vector<16x128xf32>
    %14 = arith.mulf %8, %13 : vector<16x128xf32>
    %c0_9 = arith.constant 0 : index
    %c0_10 = arith.constant 0 : index
    %15 = vector.load %arg5[%c0_9, %c0_10] : memref<16x1xf32, #tpu.memory_space<vmem>>, vector<16x1xf32>
    %16 = vector.broadcast %15 : vector<16x1xf32> to vector<16x128xf32>
    %17 = arith.mulf %14, %16 : vector<16x128xf32>
    %c0_11 = arith.constant 0 : index
    %c0_12 = arith.constant 0 : index
    %18 = vector.load %arg6[%c0_11, %c0_12] : memref<16x1xf32, #tpu.memory_space<vmem>>, vector<16x1xf32>
    %19 = vector.broadcast %18 : vector<16x1xf32> to vector<16x128xf32>
    %20 = arith.addf %17, %19 : vector<16x128xf32>
    %cst_13 = arith.constant 5.000000e-01 : f32
    %21 = vector.broadcast %cst_13 : f32 to vector<16x128xf32>
    %22 = arith.mulf %21, %20 : vector<16x128xf32>
    %cst_14 = arith.constant 5.000000e-01 : f32
    %23 = vector.broadcast %cst_14 : f32 to vector<16x128xf32>
    %24 = arith.mulf %23, %20 : vector<16x128xf32>
    %25 = math.tanh %24 : vector<16x128xf32>
    %cst_15 = arith.constant 1.000000e+00 : f32
    %26 = vector.broadcast %cst_15 : f32 to vector<16x128xf32>
    %27 = arith.addf %25, %26 : vector<16x128xf32>
    %28 = arith.mulf %22, %27 : vector<16x128xf32>
    %c0_16 = arith.constant 0 : index
    %c0_17 = arith.constant 0 : index
    %29 = vector.load %arg7[%c0_16, %c0_17] : memref<4x16xf32, #tpu.memory_space<vmem>>, vector<4x16xf32>
    %cst_18 = arith.constant dense<0.000000e+00> : vector<4x128xf32>
    %30 = tpu.matmul %29, %28, %cst_18 {dimension_numbers = #tpu.dot_dimension_numbers<[1], [0], [0], [1], [0, 0, 1, 1], [], []>} : vector<4x16xf32>, vector<16x128xf32>, vector<4x128xf32> -> vector<4x128xf32>
    %c0_19 = arith.constant 0 : index
    %c0_20 = arith.constant 0 : index
    %31 = vector.load %arg8[%c0_19, %c0_20] : memref<4x1xf32, #tpu.memory_space<vmem>>, vector<4x1xf32>
    %32 = vector.broadcast %31 : vector<4x1xf32> to vector<4x128xf32>
    %33 = arith.addf %30, %32 : vector<4x128xf32>
    %34 = arith.addf %33, %1 : vector<4x128xf32>
    %c0_21 = arith.constant 0 : index
    %c0_22 = arith.constant 0 : index
    %c0_23 = arith.constant 0 : index
    %35 = vector.load %arg9[%c0_21, %c0_22, %c0_23] : memref<1x4x128xf32, #tpu.memory_space<vmem>>, vector<1x4x128xf32>
    %36 = vector.shape_cast %35 : vector<1x4x128xf32> to vector<4x128xf32>
    %37 = vector.shape_cast %34 : vector<4x128xf32> to vector<1x4x128xf32>
    tpu.vector_store %arg9[%c0_21, %c0_22, %c0_23], %37 {strides = array<i32>} : memref<1x4x128xf32, #tpu.memory_space<vmem>>, vector<1x4x128xf32>,
    return
  }
  func.func @transform_0(%arg0: i32, %arg1: i32) -> (i32, i32, i32) {
    %c0_i32 = arith.constant 0 : i32
    %c0_i32_0 = arith.constant 0 : i32
    return %arg0, %c0_i32, %arg1 : i32, i32, i32
  }
  func.func @transform_1(%arg0: i32, %arg1: i32) -> (i32, i32) {
    %c0_i32 = arith.constant 0 : i32
    %c0_i32_0 = arith.constant 0 : i32
    %c0_i32_1 = arith.constant 0 : i32
    return %c0_i32, %c0_i32_0 : i32, i32
  }
  func.func @transform_2(%arg0: i32, %arg1: i32) -> (i32, i32) {
    %c0_i32 = arith.constant 0 : i32
    %c0_i32_0 = arith.constant 0 : i32
    %c0_i32_1 = arith.constant 0 : i32
    return %c0_i32, %c0_i32_0 : i32, i32
  }
  func.func @transform_3(%arg0: i32, %arg1: i32) -> (i32, i32) {
    %c0_i32 = arith.constant 0 : i32
    %c0_i32_0 = arith.constant 0 : i32
    %c0_i32_1 = arith.constant 0 : i32
    return %c0_i32, %c0_i32_0 : i32, i32
  }
  func.func @transform_4(%arg0: i32, %arg1: i32) -> (i32, i32) {
    %c0_i32 = arith.constant 0 : i32
    %c0_i32_0 = arith.constant 0 : i32
    %c0_i32_1 = arith.constant 0 : i32
    return %c0_i32, %c0_i32_0 : i32, i32
  }
  func.func @transform_5(%arg0: i32, %arg1: i32) -> (i32, i32) {
    %c0_i32 = arith.constant 0 : i32
    %c0_i32_0 = arith.constant 0 : i32
    %c0_i32_1 = arith.constant 0 : i32
    return %c0_i32, %c0_i32_0 : i32, i32
  }
  func.func @transform_6(%arg0: i32, %arg1: i32) -> (i32, i32) {
    %c0_i32 = arith.constant 0 : i32
    %c0_i32_0 = arith.constant 0 : i32
    %c0_i32_1 = arith.constant 0 : i32
    return %c0_i32, %c0_i32_0 : i32, i32
  }
  func.func @transform_7(%arg0: i32, %arg1: i32) -> (i32, i32, i32) {
    %c0_i32 = arith.constant 0 : i32
    %c0_i32_0 = arith.constant 0 : i32
    return %arg0, %c0_i32, %arg1 : i32, i32, i32
  }
}

</mosaic_0001>

<llo_original>
// kernel: tpu_custom_call.1
$region0: #{tpu_custom_call.1}
  #allocation0 [shape = 'u32[]', space=smem, size = 0x4, offset = 0x4, fixed_abs, tag = 'smem constant byte address 0x4 - core index']
  #allocation1 [shape = 'u32[144,128]{1,0:T(1,128)}', space=vmem, size = 0x12000, scoped, tag = 'internal scratch']
  %s0 = inlined_call_operand.vmem [shape: f32[2,4,256], index: 0, kind: input, shape index: {}]
  %s1 = inlined_call_operand.vmem [shape: f32[16,4], index: 1, kind: input, shape index: {}]
  %s2 = inlined_call_operand.vmem [shape: f32[16,1], index: 2, kind: input, shape index: {}]
  %s3 = inlined_call_operand.vmem [shape: f32[16,1], index: 3, kind: input, shape index: {}]
  %s4 = inlined_call_operand.vmem [shape: f32[16,1], index: 4, kind: input, shape index: {}]
  %s5 = inlined_call_operand.vmem [shape: f32[4,16], index: 5, kind: input, shape index: {}]
  %s6 = inlined_call_operand.vmem [shape: f32[4,1], index: 6, kind: input, shape index: {}]
  %s7 = inlined_call_operand.hbm [shape: f32[2,4,256], index: 7, kind: output, shape index: {}]
  %s8 = sld [smem:[#allocation0]]
  $region61: #{tpu_custom_call.1} parent=0
    _
  %s10 = ssub.s32 1, %s8
  %s11 = scalar_select 0, %s10, %s8
  $region1: #{tpu_custom_call.1} parent=0
    #allocation2 [shape = 'u8[4096]{0}', space=vmem, size = 0x1000, scoped, tag = 'output window, operand 0']
    #allocation3 [shape = 's32[2]{0}', space=sflag, size = 0x8, scoped, tag = 'scoped memory for tpu_custom_call.1']
    %12 = vsyncpa [#allocation3], 0
    %s13 = scalar_lea.sflag [#allocation3], 1
    %14 = vsyncpa %s13, 0
    loop: start=0, step=1, limit=6
    $region2: #{tpu_custom_call.1} parent=1 // loop_pre_header
      _
    $region3: #{tpu_custom_call.1} parent=1 // loop_header
      %s16 = sphi 0, %s20
      %p17 = scmp.ge.s32.totalorder %s16, 6
      %s23 = sphi 0, %s35
      %s24 = sphi 0, %s31
      %s25 = sphi 0, %s23
      %s26 = sphi 0, %s24
      %s27 = sphi 0, %s25
      %s28 = sphi 0, %s26
      %s40 = sphi 0, %s42
      %s43 = sphi 0, %s40
      %s44 = sphi 0, %s43
      %s60 = sphi 0, %s44
      %s64 = sphi 0, %s64
      %s66 = sphi 0, %s64
      %s67 = sphi 0, %s66
      %s81 = sphi 0, %s67
      %s85 = sphi 0, %s85
      %s87 = sphi 0, %s85
      %s88 = sphi 0, %s87
      %s102 = sphi 0, %s88
      %s106 = sphi 0, %s106
      %s108 = sphi 0, %s106
      %s109 = sphi 0, %s108
      %s123 = sphi 0, %s109
      %s127 = sphi 0, %s127
      %s129 = sphi 0, %s127
      %s130 = sphi 0, %s129
      %s144 = sphi 0, %s130
      %s148 = sphi 0, %s148
      %s150 = sphi 0, %s148
      %s151 = sphi 0, %s150
      %s165 = sphi 0, %s151
      %s169 = sphi 0, %s169
      %s171 = sphi 0, %s169
      %s172 = sphi 0, %s171
      %s186 = sphi 0, %s172
      %s194 = sphi 0, %s196
      %s197 = sphi 0, %s194
      %s198 = sphi 0, %s197
      %s214 = sphi 0, %s198
    $region4: #{tpu_custom_call.1} parent=1 // loop_header_branch
      %19 = sbr.rel (%p17) target = $region8
    $region5: #{tpu_custom_call.1} parent=1 // loop_body
      %s21 = ssub.s32 %s16, 1
      %s22 = ssub.s32 %s16, 2
      %s29 = sadd.s32 1, %s24
      %p30 = scmp.ge.s32.totalorder %s29, 2
      %s31 = scalar_select %p30, 0, %s29
      %s32 = sadd.s32 1, %s23
      %s33 = scalar_select %p30, %s32, %s23
      %p34 = scmp.ge.s32.totalorder %s33, 2
      %s35 = scalar_select %p34, 0, %s33
      %s36 = ssub.s32 %s23, %s35
      %s37 = ssub.s32 %s24, %s31
      %s38 = sor.u32 %s36, %s37
      %p39 = scmp.eq.s32.totalorder %s38, 0
      %s41 = sadd.s32 %s40, 1
      %s42 = scalar_select %p39, %s40, %s41
      %p45 = pneg %p39
      %p46 = scmp.eq.s32.totalorder %s16, 3
      %p47 = por %p45, %p46
      %p48 = scmp.ne.s32.totalorder %s40, %s43
      %p49 = scmp.eq.s32.totalorder %s16, 0
      %p50 = por %p48, %p49
      %p51 = scmp.ne.s32.totalorder %s40, %s43
      %p52 = scmp.eq.s32.totalorder %s21, 3
      %p53 = por %p51, %p52
      %p54 = scmp.ne.s32.totalorder %s43, %s44
      %p55 = scmp.eq.s32.totalorder %s21, 0
      %p56 = por %p54, %p55
      %p57 = scmp.ne.s32.totalorder %s43, %s44
      %p58 = scmp.eq.s32.totalorder %s22, 3
      %p59 = por %p57, %p58
      %p61 = scmp.ne.s32.totalorder %s44, %s60
      %p62 = scmp.eq.s32.totalorder %s22, 0
      %p63 = por %p61, %p62
      %s65 = sadd.s32 %s64, 1
      %p68 = scmp.eq.s32.totalorder %s16, 3
      %p69 = scmp.ne.s32.totalorder %s64, %s66
      %p70 = scmp.eq.s32.totalorder %s16, 0
      %p71 = por %p69, %p70
      %p72 = scmp.ne.s32.totalorder %s64, %s66
      %p73 = scmp.eq.s32.totalorder %s21, 3
      %p74 = por %p72, %p73
      %p75 = scmp.ne.s32.totalorder %s66, %s67
      %p76 = scmp.eq.s32.totalorder %s21, 0
      %p77 = por %p75, %p76
      %p78 = scmp.ne.s32.totalorder %s66, %s67
      %p79 = scmp.eq.s32.totalorder %s22, 3
      %p80 = por %p78, %p79
      %p82 = scmp.ne.s32.totalorder %s67, %s81
      %p83 = scmp.eq.s32.totalorder %s22, 0
      %p84 = por %p82, %p83
      %s86 = sadd.s32 %s85, 1
      %p89 = scmp.eq.s32.totalorder %s16, 3
      %p90 = scmp.ne.s32.totalorder %s85, %s87
      %p91 = scmp.eq.s32.totalorder %s16, 0
      %p92 = por %p90, %p91
      %p93 = scmp.ne.s32.totalorder %s85, %s87
      %p94 = scmp.eq.s32.totalorder %s21, 3
      %p95 = por %p93, %p94
      %p96 = scmp.ne.s32.totalorder %s87, %s88
      %p97 = scmp.eq.s32.totalorder %s21, 0
      %p98 = por %p96, %p97
      %p99 = scmp.ne.s32.totalorder %s87, %s88
      %p100 = scmp.eq.s32.totalorder %s22, 3
      %p101 = por %p99, %p100
      %p103 = scmp.ne.s32.totalorder %s88, %s102
      %p104 = scmp.eq.s32.totalorder %s22, 0
      %p105 = por %p103, %p104
      %s107 = sadd.s32 %s106, 1
      %p110 = scmp.eq.s32.totalorder %s16, 3
      %p111 = scmp.ne.s32.totalorder %s106, %s108
      %p112 = scmp.eq.s32.totalorder %s16, 0
      %p113 = por %p111, %p112
      %p114 = scmp.ne.s32.totalorder %s106, %s108
      %p115 = scmp.eq.s32.totalorder %s21, 3
      %p116 = por %p114, %p115
      %p117 = scmp.ne.s32.totalorder %s108, %s109
      %p118 = scmp.eq.s32.totalorder %s21, 0
      %p119 = por %p117, %p118
      %p120 = scmp.ne.s32.totalorder %s108, %s109
      %p121 = scmp.eq.s32.totalorder %s22, 3
      %p122 = por %p120, %p121
      %p124 = scmp.ne.s32.totalorder %s109, %s123
      %p125 = scmp.eq.s32.totalorder %s22, 0
      %p126 = por %p124, %p125
      %s128 = sadd.s32 %s127, 1
      %p131 = scmp.eq.s32.totalorder %s16, 3
      %p132 = scmp.ne.s32.totalorder %s127, %s129
      %p133 = scmp.eq.s32.totalorder %s16, 0
      %p134 = por %p132, %p133
      %p135 = scmp.ne.s32.totalorder %s127, %s129
      %p136 = scmp.eq.s32.totalorder %s21, 3
      %p137 = por %p135, %p136
      %p138 = scmp.ne.s32.totalorder %s129, %s130
      %p139 = scmp.eq.s32.totalorder %s21, 0
      %p140 = por %p138, %p139
      %p141 = scmp.ne.s32.totalorder %s129, %s130
      %p142 = scmp.eq.s32.totalorder %s22, 3
      %p143 = por %p141, %p142
      %p145 = scmp.ne.s32.totalorder %s130, %s144
      %p146 = scmp.eq.s32.totalorder %s22, 0
      %p147 = por %p145, %p146
      %s149 = sadd.s32 %s148, 1
      %p152 = scmp.eq.s32.totalorder %s16, 3
      %p153 = scmp.ne.s32.totalorder %s148, %s150
      %p154 = scmp.eq.s32.totalorder %s16, 0
      %p155 = por %p153, %p154
      %p156 = scmp.ne.s32.totalorder %s148, %s150
      %p157 = scmp.eq.s32.totalorder %s21, 3
      %p158 = por %p156, %p157
      %p159 = scmp.ne.s32.totalorder %s150, %s151
      %p160 = scmp.eq.s32.totalorder %s21, 0
      %p161 = por %p159, %p160
      %p162 = scmp.ne.s32.totalorder %s150, %s151
      %p163 = scmp.eq.s32.totalorder %s22, 3
      %p164 = por %p162, %p163
      %p166 = scmp.ne.s32.totalorder %s151, %s165
      %p167 = scmp.eq.s32.totalorder %s22, 0
      %p168 = por %p166, %p167
      %s170 = sadd.s32 %s169, 1
      %p173 = scmp.eq.s32.totalorder %s16, 3
      %p174 = scmp.ne.s32.totalorder %s169, %s171
      %p175 = scmp.eq.s32.totalorder %s16, 0
      %p176 = por %p174, %p175
      %p177 = scmp.ne.s32.totalorder %s169, %s171
      %p178 = scmp.eq.s32.totalorder %s21, 3
      %p179 = por %p177, %p178
      %p180 = scmp.ne.s32.totalorder %s171, %s172
      %p181 = scmp.eq.s32.totalorder %s21, 0
      %p182 = por %p180, %p181
      %p183 = scmp.ne.s32.totalorder %s171, %s172
      %p184 = scmp.eq.s32.totalorder %s22, 3
      %p185 = por %p183, %p184
      %p187 = scmp.ne.s32.totalorder %s172, %s186
      %p188 = scmp.eq.s32.totalorder %s22, 0
      %p189 = por %p187, %p188
      %s190 = ssub.s32 %s23, %s35
      %s191 = ssub.s32 %s24, %s31
      %s192 = sor.u32 %s190, %s191
      %p193 = scmp.eq.s32.totalorder %s192, 0
      %s195 = sadd.s32 %s194, 1
      %s196 = scalar_select %p193, %s194, %s195
      %p199 = pneg %p193
      %p200 = scmp.eq.s32.totalorder %s16, 3
      %p201 = por %p199, %p200
      %p202 = scmp.ne.s32.totalorder %s194, %s197
      %p203 = scmp.eq.s32.totalorder %s16, 0
      %p204 = por %p202, %p203
      %p205 = scmp.ne.s32.totalorder %s194, %s197
      %p206 = scmp.eq.s32.totalorder %s21, 3
      %p207 = por %p205, %p206
      %p208 = scmp.ne.s32.totalorder %s197, %s198
      %p209 = scmp.eq.s32.totalorder %s21, 0
      %p210 = por %p208, %p209
      %p211 = scmp.ne.s32.totalorder %s197, %s198
      %p212 = scmp.eq.s32.totalorder %s22, 3
      %p213 = por %p211, %p212
      %p215 = scmp.ne.s32.totalorder %s198, %s214
      %p216 = scmp.eq.s32.totalorder %s22, 0
      %p217 = por %p215, %p216
      %p218 = scmp.le.s32.totalorder 1, %s16
      %p219 = scmp.lt.s32.totalorder %s16, 5
      %p220 = pnand %p218, %p219
      %p221 = pneg %p220
      // Predicated region
      $region9: #{tpu_custom_call.1} parent=5 // pred_check
        _
      $region10: #{tpu_custom_call.1} parent=5 // pred_check_branch
        %223 = sbr.rel (%p220) target = $region12
      $region11: #{tpu_custom_call.1} parent=5 // pred_region
        %s224 = ssub.s32 %s16, 1
        // Predicated region
        $region13: #{tpu_custom_call.1} parent=11 // pred_check
          %p225 = pneg %p77
        $region14: #{tpu_custom_call.1} parent=11 // pred_check_branch
          %227 = sbr.rel (%p225) target = $region16
        $region15: #{tpu_custom_call.1} parent=11 // pred_region
          _
        $region16: #{tpu_custom_call.1} parent=11 // pred_fallthru
          _
        // Predicated region
        $region17: #{tpu_custom_call.1} parent=11 // pred_check
          %p228 = pneg %p98
        $region18: #{tpu_custom_call.1} parent=11 // pred_check_branch
          %230 = sbr.rel (%p228) target = $region20
        $region19: #{tpu_custom_call.1} parent=11 // pred_region
          _
        $region20: #{tpu_custom_call.1} parent=11 // pred_fallthru
          _
        // Predicated region
        $region21: #{tpu_custom_call.1} parent=11 // pred_check
          %p231 = pneg %p119
        $region22: #{tpu_custom_call.1} parent=11 // pred_check_branch
          %233 = sbr.rel (%p231) target = $region24
        $region23: #{tpu_custom_call.1} parent=11 // pred_region
          _
        $region24: #{tpu_custom_call.1} parent=11 // pred_fallthru
          _
        // Predicated region
        $region25: #{tpu_custom_call.1} parent=11 // pred_check
          %p234 = pneg %p140
        $region26: #{tpu_custom_call.1} parent=11 // pred_check_branch
          %236 = sbr.rel (%p234) target = $region28
        $region27: #{tpu_custom_call.1} parent=11 // pred_region
          _
        $region28: #{tpu_custom_call.1} parent=11 // pred_fallthru
          _
        // Predicated region
        $region29: #{tpu_custom_call.1} parent=11 // pred_check
          %p237 = pneg %p161
        $region30: #{tpu_custom_call.1} parent=11 // pred_check_branch
          %239 = sbr.rel (%p237) target = $region32
        $region31: #{tpu_custom_call.1} parent=11 // pred_region
          _
        $region32: #{tpu_custom_call.1} parent=11 // pred_fallthru
          _
        // Predicated region
        $region33: #{tpu_custom_call.1} parent=11 // pred_check
          %p240 = pneg %p182
        $region34: #{tpu_custom_call.1} parent=11 // pred_check_branch
          %242 = sbr.rel (%p240) target = $region36
        $region35: #{tpu_custom_call.1} parent=11 // pred_region
          _
        $region36: #{tpu_custom_call.1} parent=11 // pred_fallthru
          _
      $region12: #{tpu_custom_call.1} parent=5 // pred_fallthru
        _
      %p243 = scmp.lt.s32.totalorder %s16, 4
      // Predicated region
      $region37: #{tpu_custom_call.1} parent=5 // pred_check
        %p244 = pneg %p243
      $region38: #{tpu_custom_call.1} parent=5 // pred_check_branch
        %246 = sbr.rel (%p244) target = $region40
      $region39: #{tpu_custom_call.1} parent=5 // pred_region
        // Predicated region
        $region41: #{tpu_custom_call.1} parent=39 // pred_check
          %p247 = pneg %p50
        $region42: #{tpu_custom_call.1} parent=39 // pred_check_branch
          %249 = sbr.rel (%p247) target = $region44
        $region43: #{tpu_custom_call.1} parent=39 // pred_region
          %p250 = scmp.lt.s32.totalorder %s23, 1
          %s251 = scalar_select %p250, %s23, 1
          %p252 = scmp.lt.s32.totalorder %s24, 1
          %s253 = scalar_select %p252, %s24, 1
          %s254 = smul.addr %s251, 2
          %s255 = sadd.s32 %s253, %s254
          %s256 = smul.addr %s255, 4
          %s257 = scalar_lea.vmem %s0, %s256
        $region44: #{tpu_custom_call.1} parent=39 // pred_fallthru
          _
      $region40: #{tpu_custom_call.1} parent=5 // pred_fallthru
        _
      %p258 = scmp.le.s32.totalorder 1, %s16
      %p259 = scmp.lt.s32.totalorder %s16, 5
      %p260 = pnand %p258, %p259
      %p261 = pneg %p260
      // Predicated region
      $region45: #{tpu_custom_call.1} parent=5 // pred_check
        _
      $region46: #{tpu_custom_call.1} parent=5 // pred_check_branch
        %263 = sbr.rel (%p260) target = $region48
      $region47: #{tpu_custom_call.1} parent=5 // pred_region
        %s264 = ssub.s32 %s16, 1
        %p265 = scmp.lt.s32.totalorder %s25, 1
        %s266 = scalar_select %p265, %s25, 1
        %p267 = scmp.lt.s32.totalorder %s26, 1
        %s268 = scalar_select %p267, %s26, 1
        %s269 = smul.addr %s266, 2
        %s270 = sadd.s32 %s268, %s269
        %s271 = smul.addr %s270, 4
        %s272 = scalar_lea.vmem %s0, %s271
        %p273 = pneg %p56
        %p274 = pneg %p53
        %p275 = pneg %p77
        %p276 = pneg %p74
        %p277 = pneg %p98
        %p278 = pneg %p95
        %p279 = pneg %p119
        %p280 = pneg %p116
        %p281 = pneg %p140
        %p282 = pneg %p137
        %p283 = pneg %p161
        %p284 = pneg %p158
        %p285 = pneg %p182
        %p286 = pneg %p179
        %p287 = pneg %p210
        %p288 = pneg %p207
        %s289 = sand.u32 %s197, 1
        %s290 = scalar_lea.sflag [#allocation3], %s289
        %s291 = sand.u32 %s197, 1
        %s292 = smul.addr %s291, 4
        %s293 = scalar_lea.vmem [#allocation2], %s292
        %p294 = scmp.lt.s32.totalorder %s25, 1
        %s295 = scalar_select %p294, %s25, 1
        %p296 = scmp.lt.s32.totalorder %s26, 1
        %s297 = scalar_select %p296, %s26, 1
        %s298 = smul.addr %s295, 2
        %s299 = sadd.s32 %s297, %s298
        %s300 = smul.addr %s299, 4
        %s301 = scalar_lea.vmem %s0, %s300
        %v302 = vld [vmem:[%s301] sm:$0xf]
        %v303 = vld [vmem:[%s1] sm:$0xff]
        %v304 = vld [vmem:[%s1 + $0x8] sm:$0xff]
        %v305 = vld [vmem:[%s2] sm:$0xff]
        %v306 = vld [vmem:[%s2 + $0x8] sm:$0xff]
        %308 = vset.pattern.permute.xlu0 0
        %309 = vperm.xlu0 %308, %v305
        %v310 = vpop.permute.xlu0 %309
        %313 = vset.pattern.permute.xlu0 0
        %314 = vperm.xlu0 %313, %v306
        %v315 = vpop.permute.xlu0 %314
        %vm317 = vcmask 31744
        %v319 = vsel %vm317, %v303, 0
        %v322 = vsel %vm317, %v304, 0
        %vm324 = vcmask 1043456
        %v326 = vsel %vm324, %v302, 0
        %328 = vmatprep.subr.mxu0 0.0
        %329 = vmatpush1.msra.mxu0 0.0
        %330 = vmatprep.subr.mxu0 0.0
        %331 = vmatpush1.msra.mxu0 0.0
        %332 = vmatprep.subr.mxu0 0.0
        %333 = vmatpush1.msra.mxu0 0.0
        %334 = vmatprep.subr.mxu0 0.0
        %335 = vmatpush1.msra.mxu0 0.0
        %336 = vmatprep.subr.mxu0 0.0
        %337 = vmatpush1.msra.mxu0 0.0
        %338 = vmatprep.subr.mxu0 0.0
        %339 = vmatpush1.msra.mxu0 0.0
        %340 = vmatprep.subr.mxu0 0.0
        %341 = vmatpush1.msra.mxu0 0.0
        %342 = vmatprep.subr.mxu0 0.0
        %343 = vmatpush1.msra.mxu0 0.0
        %344 = vmatprep.subr.mxu0 0.0
        %345 = vmatpush1.msra.mxu0 0.0
        %346 = vmatprep.subr.mxu0 0.0
        %347 = vmatpush1.msra.mxu0 0.0
        %348 = vmatprep.subr.mxu0 0.0
        %349 = vmatpush1.msra.mxu0 0.0
        %350 = vmatprep.subr.mxu0 0.0
        %351 = vmatpush1.msra.mxu0 0.0
        %352 = vmatprep.subr.mxu0 0.0
        %353 = vmatpush1.msra.mxu0 0.0
        %354 = vmatprep.subr.mxu0 0.0
        %355 = vmatpush1.msra.mxu0 0.0
        %356 = vmatprep.subr.mxu0 0.0
        %357 = vmatpush1.msra.mxu0 0.0
        %358 = vmatprep.subr.mxu0 0.0
        %359 = vmatpush1.msra.mxu0 %v326
        %360 = vmatprep.subr.mxu0 0.0
        %361 = vmatpush2.msra.mxu0 0.0
        %362 = vmatprep.subr.mxu0 0.0
        %363 = vmatpush2.msra.mxu0 0.0
        %364 = vmatprep.subr.mxu0 0.0
        %365 = vmatpush2.msra.mxu0 0.0
        %366 = vmatprep.subr.mxu0 0.0
        %367 = vmatpush2.msra.mxu0 0.0
        %368 = vmatprep.subr.mxu0 0.0
        %369 = vmatpush2.msra.mxu0 0.0
        %370 = vmatprep.subr.mxu0 0.0
        %371 = vmatpush2.msra.mxu0 0.0
        %372 = vmatprep.subr.mxu0 0.0
        %373 = vmatpush2.msra.mxu0 0.0
        %374 = vmatprep.subr.mxu0 0.0
        %375 = vmatpush2.msra.mxu0 0.0
        %376 = vmatprep.subr.mxu0 0.0
        %377 = vmatpush2.msra.mxu0 0.0
        %378 = vmatprep.subr.mxu0 0.0
        %379 = vmatpush2.msra.mxu0 0.0
        %380 = vmatprep.subr.mxu0 0.0
        %381 = vmatpush2.msra.mxu0 0.0
        %382 = vmatprep.subr.mxu0 0.0
        %383 = vmatpush2.msra.mxu0 0.0
        %384 = vmatprep.subr.mxu0 0.0
        %385 = vmatpush2.msra.mxu0 0.0
        %386 = vmatprep.subr.mxu0 0.0
        %387 = vmatpush2.msra.mxu0 0.0
        %388 = vmatprep.subr.mxu0 0.0
        %389 = vmatpush2.msra.mxu0 0.0
        %390 = vmatprep.subr.mxu0 0.0
        %391 = vmatpush2.msra.mxu0 0.0
        %392 = vmatprep.mubr.f32.mxu0 0.0
        %393 = vmatmul.mubr.f32.gmra.mxu0 %v319
        %v394 = vpop.f32.mrf.mxu0
        %v395 = vadd.f32 %v310, %v394
        %v396 = vpop.f32.mrf.mxu0
        %397 = vmatprep.mubr.f32.mxu0 0.0
        %398 = vmatmul.mubr.f32.gmra.mxu0 %v322
        %v399 = vpop.f32.mrf.mxu0
        %v400 = vadd.f32 %v315, %v399
        %v401 = vpop.f32.mrf.mxu0
        %402 = vdwg.mxu0
        %v403 = vmul.f32 %v395, 0.5
        %v404 = vmul.f32 %v400, 0.5
        %v405 = vtanh.pop %v403
        %v406 = vtanh.pop %v404
        %v407 = vadd.f32 %v405, 1.0
        %v408 = vadd.f32 %v406, 1.0
        %v409 = vmul.f32 %v403, %v407
        %v410 = vmul.f32 %v404, %v408
        %v411 = vld [vmem:[%s3] sm:$0xff]
        %v412 = vld [vmem:[%s3 + $0x8] sm:$0xff]
        %414 = vset.pattern.permute.xlu0 0
        %415 = vperm.xlu0 %414, %v411
        %v416 = vpop.permute.xlu0 %415
        %419 = vset.pattern.permute.xlu0 0
        %420 = vperm.xlu0 %419, %v412
        %v421 = vpop.permute.xlu0 %420
        %v423 = vmul.f32 %v409, %v416
        %v424 = vmul.f32 %v410, %v421
        %v425 = vld [vmem:[%s4] sm:$0xff]
        %v426 = vld [vmem:[%s4 + $0x8] sm:$0xff]
        %428 = vset.pattern.permute.xlu0 0
        %429 = vperm.xlu0 %428, %v425
        %v430 = vpop.permute.xlu0 %429
        %433 = vset.pattern.permute.xlu0 0
        %434 = vperm.xlu0 %433, %v426
        %v435 = vpop.permute.xlu0 %434
        %v437 = vadd.f32 %v423, %v430
        %v438 = vadd.f32 %v424, %v435
        %v439 = vmul.f32 %v437, 0.5
        %v440 = vmul.f32 %v438, 0.5
        %v441 = vtanh.pop %v439
        %v442 = vtanh.pop %v440
        %v443 = vadd.f32 %v441, 1.0
        %v444 = vadd.f32 %v442, 1.0
        %v445 = vmul.f32 %v439, %v443
        %v446 = vmul.f32 %v440, %v444
        %v447 = vld [vmem:[%s5] sm:$0xf]
        %v448 = vld [vmem:[%s6] sm:$0xf]
        %450 = vset.pattern.permute.xlu0 0
        %451 = vperm.xlu0 %450, %v448
        %v452 = vpop.permute.xlu0 %451
        %vm454 = vcmask 130048
        %v456 = vsel %vm454, %v447, 0
        %458 = vmatprep.subr.mxu0 0.0
        %459 = vmatpush1.msra.mxu0 0.0
        %460 = vmatprep.subr.mxu0 0.0
        %461 = vmatpush1.msra.mxu0 0.0
        %462 = vmatprep.subr.mxu0 0.0
        %463 = vmatpush1.msra.mxu0 0.0
        %464 = vmatprep.subr.mxu0 0.0
        %465 = vmatpush1.msra.mxu0 0.0
        %466 = vmatprep.subr.mxu0 0.0
        %467 = vmatpush1.msra.mxu0 0.0
        %468 = vmatprep.subr.mxu0 0.0
        %469 = vmatpush1.msra.mxu0 0.0
        %470 = vmatprep.subr.mxu0 0.0
        %471 = vmatpush1.msra.mxu0 0.0
        %472 = vmatprep.subr.mxu0 0.0
        %473 = vmatpush1.msra.mxu0 0.0
        %474 = vmatprep.subr.mxu0 0.0
        %475 = vmatpush1.msra.mxu0 0.0
        %476 = vmatprep.subr.mxu0 0.0
        %477 = vmatpush1.msra.mxu0 0.0
        %478 = vmatprep.subr.mxu0 0.0
        %479 = vmatpush1.msra.mxu0 0.0
        %480 = vmatprep.subr.mxu0 0.0
        %481 = vmatpush1.msra.mxu0 0.0
        %482 = vmatprep.subr.mxu0 0.0
        %483 = vmatpush1.msra.mxu0 0.0
        %484 = vmatprep.subr.mxu0 0.0
        %485 = vmatpush1.msra.mxu0 0.0
        %486 = vmatprep.subr.mxu0 0.0
        %487 = vmatpush1.msra.mxu0 %v446
        %488 = vmatprep.subr.mxu0 0.0
        %489 = vmatpush1.msra.mxu0 %v445
        %490 = vmatprep.subr.mxu0 0.0
        %491 = vmatpush2.msra.mxu0 0.0
        %492 = vmatprep.subr.mxu0 0.0
        %493 = vmatpush2.msra.mxu0 0.0
        %494 = vmatprep.subr.mxu0 0.0
        %495 = vmatpush2.msra.mxu0 0.0
        %496 = vmatprep.subr.mxu0 0.0
        %497 = vmatpush2.msra.mxu0 0.0
        %498 = vmatprep.subr.mxu0 0.0
        %499 = vmatpush2.msra.mxu0 0.0
        %500 = vmatprep.subr.mxu0 0.0
        %501 = vmatpush2.msra.mxu0 0.0
        %502 = vmatprep.subr.mxu0 0.0
        %503 = vmatpush2.msra.mxu0 0.0
        %504 = vmatprep.subr.mxu0 0.0
        %505 = vmatpush2.msra.mxu0 0.0
        %506 = vmatprep.subr.mxu0 0.0
        %507 = vmatpush2.msra.mxu0 0.0
        %508 = vmatprep.subr.mxu0 0.0
        %509 = vmatpush2.msra.mxu0 0.0
        %510 = vmatprep.subr.mxu0 0.0
        %511 = vmatpush2.msra.mxu0 0.0
        %512 = vmatprep.subr.mxu0 0.0
        %513 = vmatpush2.msra.mxu0 0.0
        %514 = vmatprep.subr.mxu0 0.0
        %515 = vmatpush2.msra.mxu0 0.0
        %516 = vmatprep.subr.mxu0 0.0
        %517 = vmatpush2.msra.mxu0 0.0
        %518 = vmatprep.subr.mxu0 0.0
        %519 = vmatpush2.msra.mxu0 0.0
        %520 = vmatprep.subr.mxu0 0.0
        %521 = vmatpush2.msra.mxu0 0.0
        %522 = vmatprep.mubr.f32.mxu0 0.0
        %523 = vmatmul.mubr.f32.gmra.mxu0 %v456
        %v524 = vpop.f32.mrf.mxu0
        %v525 = vadd.f32 %v452, %v524
        %v526 = vpop.f32.mrf.mxu0
        %527 = vdwg.mxu0
        %v528 = vadd.f32 %v525, %v302
        %529 = vst [vmem:[%s293] sm:$0xf] %v528
        %s530 = sand.u32 %s197, 1
        %s531 = scalar_lea.sflag [#allocation3], %s530
        %s532 = sand.u32 %s197, 1
        %s533 = smul.addr %s532, 4
        %s534 = scalar_lea.vmem [#allocation2], %s533
        // Predicated region
        $region49: #{tpu_custom_call.1} parent=47 // pred_check
          %p535 = pneg %p207
        $region50: #{tpu_custom_call.1} parent=47 // pred_check_branch
          %537 = sbr.rel (%p535) target = $region52
        $region51: #{tpu_custom_call.1} parent=47 // pred_region
          %s539 = ssub.s32 64, 64
          %540 = vsyncadd %s531, %s539
          %s541 = smul.addr %s25, 2
          %s542 = sadd.s32 %s26, %s541
          %s543 = smul.addr %s542, 64
          %s544 = scalar_lea.hbm %s7, %s543
          %s546 = sshll.u32 %s534, 4
          %s547 = int_to_ptr.vmem [resolvable:$true] %s546
          %549 = dma.vmem_to_hbm [thread:$0]  %s547, 64, %s544, %s531
        $region52: #{tpu_custom_call.1} parent=47 // pred_fallthru
          _
      $region48: #{tpu_custom_call.1} parent=5 // pred_fallthru
        _
      %p550 = scmp.le.s32.totalorder 2, %s16
      // Predicated region
      $region53: #{tpu_custom_call.1} parent=5 // pred_check
        %p551 = pneg %p550
      $region54: #{tpu_custom_call.1} parent=5 // pred_check_branch
        %553 = sbr.rel (%p551) target = $region56
      $region55: #{tpu_custom_call.1} parent=5 // pred_region
        %s554 = ssub.s32 %s16, 2
        // Predicated region
        $region57: #{tpu_custom_call.1} parent=55 // pred_check
          %p555 = pneg %p213
        $region58: #{tpu_custom_call.1} parent=55 // pred_check_branch
          %557 = sbr.rel (%p555) target = $region60
        $region59: #{tpu_custom_call.1} parent=55 // pred_region
          %s558 = sand.u32 %s198, 1
          %s559 = scalar_lea.sflag [#allocation3], %s558
          %s560 = sand.u32 %s198, 1
          %s561 = smul.addr %s560, 4
          %s562 = scalar_lea.vmem [#allocation2], %s561
          %563 = dma.done %s559, 64
        $region60: #{tpu_custom_call.1} parent=55 // pred_fallthru
          _
      $region56: #{tpu_custom_call.1} parent=5 // pred_fallthru
        _
    $region6: #{tpu_custom_call.1} parent=1 // loop_footer
      %s20 = sadd.s32 1, %s16
    $region7: #{tpu_custom_call.1} parent=1 // loop_footer_branch
      %15 = sbr.rel target = $region3
    $region8: #{tpu_custom_call.1} parent=1 // loop_exit
      _
    %564 = vsyncpa [#allocation3], 1
    %s565 = scalar_lea.sflag [#allocation3], 1
    %566 = vsyncpa %s565, 1

</llo_original>
